<compile_context>
chip_gen: v7x
topology: tpu7x:2x2x1
jax: 0.10.0
libtpu: 0.0.40
codegen_flags: <defaults>
</compile_context>

<pallas_src>
import jax
import jax.numpy as jnp
from jax.experimental import pallas as pl
from jax.experimental.pallas import tpu as pltpu

_MIB = 1024 * 1024


def _copy_kernel(x_ref, o_ref):
    # One lane-dense, MiB-scale block per grid step.
    o_ref[...] = x_ref[...]


def _pick_lane_dim(total: int, cap_elems: int = 32768) -> int:
    """Largest multiple of 128 that divides `total` and is <= cap_elems (0 if none)."""
    c = min(cap_elems, total) // 128
    while c >= 1:
        lane = 128 * c
        if total % lane == 0:
            return lane
        c -= 1
    return 0


def _vmem_capacity_bytes() -> int:
    try:
        info = pltpu.get_tpu_info()
        return int(getattr(info, "vmem_capacity_bytes", 64 * _MIB))
    except Exception:
        return 64 * _MIB  # conservative (v7x-sized) fallback


def _pallas_copy_2d(x2: jax.Array) -> jax.Array:
    """Identity copy of a 2D array through a pipelined Pallas kernel."""
    rows, cols = x2.shape
    itemsize = jnp.dtype(x2.dtype).itemsize

    # Packed-sublane granularity: 8 rows (32-bit), 16 (16-bit), 32 (8-bit).
    sub = 8 * max(1, 4 // itemsize)

    # Generation-aware block target: ~16 MiB on 128 MiB-VMEM chips (v5e/v6e),
    # ~8 MiB on 64 MiB-VMEM chips (v7x).  Residency is ~4x block (double-
    # buffered input + output), which stays well under the physical budget.
    vmem_cap = _vmem_capacity_bytes()
    target_block_bytes = 16 * _MIB if vmem_cap >= 128 * _MIB else 8 * _MIB

    # Column tile: full width if modest, otherwise a multiple-of-128 tile small
    # enough that even a `sub`-row block stays within the block budget.
    max_row_bytes = target_block_bytes // sub
    if cols * itemsize <= max_row_bytes:
        bn = cols
    else:
        bn = max(128, ((max_row_bytes // itemsize) // 128) * 128)
        bn = min(bn, cols)

    # Row tile: fill the block budget, rounded to the packed-sublane multiple.
    row_block_bytes = bn * itemsize
    bm = max(1, target_block_bytes // row_block_bytes)
    if bm >= rows:
        bm = rows
        # Keep >=4 grid steps when possible so in/out DMAs overlap and both
        # TensorCores on a v7x chip get work.
        if rows >= 4 * sub and pl.cdiv(cols, bn) < 4:
            bm = pl.cdiv(rows, 4)
            bm = pl.cdiv(bm, sub) * sub
    else:
        bm = max(sub, (bm // sub) * sub)
    bm = min(bm, rows)

    block_bytes = bm * bn * itemsize
    vmem_limit = max(32 * _MIB, 4 * block_bytes + 2 * _MIB)
    vmem_limit = min(vmem_limit, max(32 * _MIB, vmem_cap - 8 * _MIB))

    grid = (pl.cdiv(rows, bm), pl.cdiv(cols, bn))

    return pl.pallas_call(
        _copy_kernel,
        out_shape=jax.ShapeDtypeStruct((rows, cols), x2.dtype),
        grid=grid,
        in_specs=[pl.BlockSpec((bm, bn), lambda i, j: (i, j))],
        out_specs=pl.BlockSpec((bm, bn), lambda i, j: (i, j)),
        compiler_params=pltpu.CompilerParams(
            dimension_semantics=("parallel", "parallel"),
            vmem_limit_bytes=vmem_limit,
        ),
        cost_estimate=pl.CostEstimate(
            flops=0,
            transcendentals=0,
            bytes_accessed=2 * rows * cols * itemsize,
        ),
    )(x2)


def healpix_fold_faces(
    x: jax.Array, enable_nhwc: bool = False, use_pallas: bool = False
) -> jax.Array:
    """HEALPixFoldFaces forward: [B, F, C, H, W] -> [B*F, C, H, W].

    use_pallas=False (default, production): metadata-only reshape, zero HBM
    traffic.  use_pallas=True: route the data through an optimized Pallas copy
    kernel (2x tensor bytes of HBM traffic -- only use when a materialized
    contiguous copy is explicitly required).
    """
    B, F, C, H, W = x.shape
    NF = B * F
    # TODO(synk): enable_nhwc (channels_last) has no value-level JAX equivalent.

    if not use_pallas:
        return jnp.reshape(x, (NF, C, H, W))

    total = x.size
    # The copy is shape-agnostic: pick a lane-dense 2D factorization (rows, L)
    # with L a multiple of 128, so stores are unmasked regardless of C/H/W.
    lane = _pick_lane_dim(total)
    if lane:
        x2 = jnp.reshape(x, (total // lane, lane))
    else:
        # total not a multiple of 128: fall back to the natural (B*F, C*H*W)
        # slab (tail blocks use masked stores; correctness unaffected).
        x2 = jnp.reshape(x, (NF, C * H * W))

    y2 = _pallas_copy_2d(x2)
    return jnp.reshape(y2, (NF, C, H, W))


if __name__ == "__main__":
    key = jax.random.PRNGKey(0)
    # HEALPix has 12 faces; keep other dims small.
    B, F, C, H, W = 2, 12, 4, 16, 16
    x = jax.random.normal(key, (B, F, C, H, W), dtype=jnp.float32)

    # Exercise the Pallas copy path.
    y = jax.block_until_ready(
        healpix_fold_faces(x, enable_nhwc=False, use_pallas=True)
    )

    # Reference: plain reshape semantics of the PyTorch module.
    y_ref = jnp.reshape(x, (B * F, C, H, W))
    assert y.shape == (B * F, C, H, W), y.shape
    assert y.dtype == x.dtype
    assert bool(jnp.array_equal(y, y_ref))

    # Zero-copy production default.
    y_fast = jax.block_until_ready(healpix_fold_faces(x))
    assert bool(jnp.array_equal(y_fast, y_ref))

    print("KERNEL_OK")
</pallas_src>

<mosaic_0001>
module attributes {stable_mosaic.version = 11 : i64} {
  func.func @_copy_kernel(%arg0: i32, %arg1: i32, %arg2: memref<1x24576xf32, #tpu.memory_space<vmem>>, %arg3: memref<1x24576xf32, #tpu.memory_space<vmem>>) attributes {dimension_semantics = [#tpu.dimension_semantics<parallel>, #tpu.dimension_semantics<parallel>], iteration_bounds = array<i64: 1, 1>, scalar_prefetch = 0 : i64, scratch_operands = 0 : i64, tpu.core_type = #tpu.core_type<tc>, window_params = [{transform_indices = @transform_0, window_bounds = array<i64: 1, 24576>}, {transform_indices = @transform_1, window_bounds = array<i64: 1, 24576>}]} {
    %c0 = arith.constant 0 : index
    %c0_0 = arith.constant 0 : index
    %0 = vector.load %arg2[%c0, %c0_0] : memref<1x24576xf32, #tpu.memory_space<vmem>>, vector<1x24576xf32>
    %c0_1 = arith.constant 0 : index
    %c0_2 = arith.constant 0 : index
    %1 = vector.load %arg3[%c0_1, %c0_2] : memref<1x24576xf32, #tpu.memory_space<vmem>>, vector<1x24576xf32>
    tpu.vector_store %arg3[%c0_1, %c0_2], %0 {strides = array<i32>} : memref<1x24576xf32, #tpu.memory_space<vmem>>, vector<1x24576xf32>,
    return
  }
  func.func @transform_0(%arg0: i32, %arg1: i32) -> (i32, i32) {
    %c0_i32 = arith.constant 0 : i32
    return %arg0, %arg1 : i32, i32
  }
  func.func @transform_1(%arg0: i32, %arg1: i32) -> (i32, i32) {
    %c0_i32 = arith.constant 0 : i32
    return %arg0, %arg1 : i32, i32
  }
}

</mosaic_0001>

<llo_original>
// kernel: tpu_custom_call.1
$region0: #{tpu_custom_call.1}
  #allocation0 [shape = 'u32[]', space=smem, size = 0x4, offset = 0x4, fixed_abs, tag = 'smem constant byte address 0x4 - core index']
  #allocation1 [shape = 'u32[144,128]{1,0:T(1,128)}', space=vmem, size = 0x12000, scoped, tag = 'internal scratch']
  %s0 = inlined_call_operand.hbm [shape: f32[1,24576], index: 0, kind: input, shape index: {}]
  %s1 = inlined_call_operand.hbm [shape: f32[1,24576], index: 1, kind: output, shape index: {}]
  %s2 = sld [smem:[#allocation0]]
  $region18: #{tpu_custom_call.1} parent=0
    _
  %s4 = ssub.s32 1, %s2
  %s5 = scalar_select 0, %s4, %s2
  $region1: #{tpu_custom_call.1} parent=0
    #allocation2 [shape = 'u8[98304]{0}', space=vmem, size = 0x18000, scoped, tag = 'input window, operand 0, single buffered']
    #allocation3 [shape = 's32[1]{0}', space=sflag, size = 0x4, scoped, tag = 'scoped memory for tpu_custom_call.1']
    #allocation4 [shape = 's32[1]{0}', space=sflag, size = 0x4, scoped, tag = 'scoped memory for tpu_custom_call.1']
    #allocation5 [shape = 'u8[98304]{0}', space=vmem, size = 0x18000, scoped, tag = 'output window, operand 0, single buffered']
    %6 = vsyncpa [#allocation3], 0
    %7 = vsyncpa [#allocation4], 0
    // Predicated region
    $region2: #{tpu_custom_call.1} parent=1 // pred_check
      _
    $region3: #{tpu_custom_call.1} parent=1 // pred_check_branch
      %9 = sbr.rel (0) target = $region5
    $region4: #{tpu_custom_call.1} parent=1 // pred_region
      %s11 = ssub.s32 3072, 3072
      %12 = vsyncadd [#allocation3], %s11
      %s14 = sshll.u32 [#allocation2], 4
      %s15 = int_to_ptr.vmem [resolvable:$true] %s14
      %17 = dma.hbm_to_vmem [thread:$0]  %s0, 3072, %s15, [#allocation3]
    $region5: #{tpu_custom_call.1} parent=1 // pred_fallthru
      _
    // Predicated region
    $region6: #{tpu_custom_call.1} parent=1 // pred_check
      _
    $region7: #{tpu_custom_call.1} parent=1 // pred_check_branch
      %19 = sbr.rel (0) target = $region9
    $region8: #{tpu_custom_call.1} parent=1 // pred_region
      %20 = dma.done [#allocation3], 3072
    $region9: #{tpu_custom_call.1} parent=1 // pred_fallthru
      _
    %v21 = vld [vmem:[#allocation2] sm:$0xff]
    %v22 = vld [vmem:[#allocation2 + $0x8] sm:$0xff]
    %v23 = vld [vmem:[#allocation2 + $0x10] sm:$0xff]
    %v24 = vld [vmem:[#allocation2 + $0x18] sm:$0xff]
    %v25 = vld [vmem:[#allocation2 + $0x20] sm:$0xff]
    %v26 = vld [vmem:[#allocation2 + $0x28] sm:$0xff]
    %v27 = vld [vmem:[#allocation2 + $0x30] sm:$0xff]
    %v28 = vld [vmem:[#allocation2 + $0x38] sm:$0xff]
    %v29 = vld [vmem:[#allocation2 + $0x40] sm:$0xff]
    %v30 = vld [vmem:[#allocation2 + $0x48] sm:$0xff]
    %v31 = vld [vmem:[#allocation2 + $0x50] sm:$0xff]
    %v32 = vld [vmem:[#allocation2 + $0x58] sm:$0xff]
    %v33 = vld [vmem:[#allocation2 + $0x60] sm:$0xff]
    %v34 = vld [vmem:[#allocation2 + $0x68] sm:$0xff]
    %v35 = vld [vmem:[#allocation2 + $0x70] sm:$0xff]
    %v36 = vld [vmem:[#allocation2 + $0x78] sm:$0xff]
    %v37 = vld [vmem:[#allocation2 + $0x80] sm:$0xff]
    %v38 = vld [vmem:[#allocation2 + $0x88] sm:$0xff]
    %v39 = vld [vmem:[#allocation2 + $0x90] sm:$0xff]
    %v40 = vld [vmem:[#allocation2 + $0x98] sm:$0xff]
    %v41 = vld [vmem:[#allocation2 + $0xa0] sm:$0xff]
    %v42 = vld [vmem:[#allocation2 + $0xa8] sm:$0xff]
    %v43 = vld [vmem:[#allocation2 + $0xb0] sm:$0xff]
    %v44 = vld [vmem:[#allocation2 + $0xb8] sm:$0xff]
    %45 = vst [vmem:[#allocation5] sm:$0xff] %v21
    %46 = vst [vmem:[#allocation5 + $0x8] sm:$0xff] %v22
    %47 = vst [vmem:[#allocation5 + $0x10] sm:$0xff] %v23
    %48 = vst [vmem:[#allocation5 + $0x18] sm:$0xff] %v24
    %49 = vst [vmem:[#allocation5 + $0x20] sm:$0xff] %v25
    %50 = vst [vmem:[#allocation5 + $0x28] sm:$0xff] %v26
    %51 = vst [vmem:[#allocation5 + $0x30] sm:$0xff] %v27
    %52 = vst [vmem:[#allocation5 + $0x38] sm:$0xff] %v28
    %53 = vst [vmem:[#allocation5 + $0x40] sm:$0xff] %v29
    %54 = vst [vmem:[#allocation5 + $0x48] sm:$0xff] %v30
    %55 = vst [vmem:[#allocation5 + $0x50] sm:$0xff] %v31
    %56 = vst [vmem:[#allocation5 + $0x58] sm:$0xff] %v32
    %57 = vst [vmem:[#allocation5 + $0x60] sm:$0xff] %v33
    %58 = vst [vmem:[#allocation5 + $0x68] sm:$0xff] %v34
    %59 = vst [vmem:[#allocation5 + $0x70] sm:$0xff] %v35
    %60 = vst [vmem:[#allocation5 + $0x78] sm:$0xff] %v36
    %61 = vst [vmem:[#allocation5 + $0x80] sm:$0xff] %v37
    %62 = vst [vmem:[#allocation5 + $0x88] sm:$0xff] %v38
    %63 = vst [vmem:[#allocation5 + $0x90] sm:$0xff] %v39
    %64 = vst [vmem:[#allocation5 + $0x98] sm:$0xff] %v40
    %65 = vst [vmem:[#allocation5 + $0xa0] sm:$0xff] %v41
    %66 = vst [vmem:[#allocation5 + $0xa8] sm:$0xff] %v42
    %67 = vst [vmem:[#allocation5 + $0xb0] sm:$0xff] %v43
    %68 = vst [vmem:[#allocation5 + $0xb8] sm:$0xff] %v44
    // Predicated region
    $region10: #{tpu_custom_call.1} parent=1 // pred_check
      _
    $region11: #{tpu_custom_call.1} parent=1 // pred_check_branch
      %70 = sbr.rel (0) target = $region13
    $region12: #{tpu_custom_call.1} parent=1 // pred_region
      %s72 = ssub.s32 3072, 3072
      %73 = vsyncadd [#allocation4], %s72
      %s75 = sshll.u32 [#allocation5], 4
      %s76 = int_to_ptr.vmem [resolvable:$true] %s75
      %78 = dma.vmem_to_hbm [thread:$0]  %s76, 3072, %s1, [#allocation4]
    $region13: #{tpu_custom_call.1} parent=1 // pred_fallthru
      _
    // Predicated region
    $region14: #{tpu_custom_call.1} parent=1 // pred_check
      _
    $region15: #{tpu_custom_call.1} parent=1 // pred_check_branch
      %80 = sbr.rel (0) target = $region17
    $region16: #{tpu_custom_call.1} parent=1 // pred_region
      %81 = dma.done [#allocation4], 3072
    $region17: #{tpu_custom_call.1} parent=1 // pred_fallthru
      _
    %82 = vsyncpa [#allocation3], 1
    %83 = vsyncpa [#allocation4], 1

</llo_original>
